<compile_context>
chip_gen: v6e
topology: v6e:2x2x1
jax: 0.10.0
libtpu: 0.0.40
codegen_flags: <defaults>
</compile_context>

<pallas_src>
import functools
from typing import NamedTuple, Optional

import jax
import jax.numpy as jnp
from jax.experimental import pallas as pl
from jax.experimental.pallas import tpu as pltpu


def _round_up(x, m):
    return (x + m - 1) // m * m


def _pick_tile(dim, candidates):
    """Largest candidate that divides `dim` exactly (dim is pre-aligned)."""
    for c in candidates:
        if c <= dim and dim % c == 0:
            return c
    return dim


def _dense_kernel(*refs, has_bias, apply_relu, cast_x, use_acc, compute_dtype):
    """Grid = (M//tm, N//tn, K//tk). K is the innermost reduction axis."""
    i = 0
    x_ref = refs[i]; i += 1
    w_ref = refs[i]; i += 1
    if has_bias:
        b_ref = refs[i]; i += 1
    else:
        b_ref = None
    o_ref = refs[i]; i += 1
    # Output tile is resident across the K axis -> accumulate straight into it
    # when the output is f32; only use a scratch accumulator otherwise.
    acc_ref = refs[i] if use_acc else o_ref

    k = pl.program_id(2)
    nk = pl.num_programs(2)

    x = x_ref[...]
    if cast_x:
        x = x.astype(compute_dtype)            # in-kernel cast: no HBM copy of x
    part = jnp.dot(x, w_ref[...], preferred_element_type=jnp.float32)

    @pl.when(k == 0)
    def _init():
        acc_ref[...] = part                    # init with first partial (no zeros pass)

    @pl.when(k > 0)
    def _accumulate():
        acc_ref[...] += part

    @pl.when(k == nk - 1)
    def _epilogue():
        z = acc_ref[...]
        if has_bias:
            z = z + b_ref[...]                 # [1, tn] broadcasts over batch rows
        if apply_relu:
            z = jnp.maximum(z, 0.0)
        o_ref[...] = z.astype(o_ref.dtype)


class DenseParams(NamedTuple):
    w_kn: jax.Array                 # [Kp, Np] pre-transposed, cast, lane-padded
    b_row: Optional[jax.Array]      # [1, Np] float32 (or None)
    n_input: int
    n_output: int


def prepare_dense_params(W, bias=None, compute_dtype=jnp.bfloat16):
    """Hoist W.T + cast + lane padding out of the per-call path (done once)."""
    n_output, n_input = W.shape
    Kp = _round_up(n_input, 128)
    Np = _round_up(n_output, 128)
    w_kn = jnp.pad(W.T.astype(compute_dtype),
                   ((0, Kp - n_input), (0, Np - n_output)))
    b_row = None
    if bias is not None:
        b_row = jnp.pad(bias.reshape(1, n_output).astype(jnp.float32),
                        ((0, 0), (0, Np - n_output)))
    return DenseParams(w_kn, b_row, n_input, n_output)


def dense_layer_forward(x, params: DenseParams, nonlinearity=None, *,
                        out_dtype=jnp.float32, force_pallas=False):
    """Pallas forward of DenseLayer: nonlinearity(x @ W.T + b.T)."""
    M, K = x.shape
    N = params.n_output
    assert K == params.n_input, (K, params.n_input)
    Kp, Np = params.w_kn.shape
    compute_dtype = params.w_kn.dtype
    has_bias = params.b_row is not None
    apply_relu = (nonlinearity == "relu")

    w_item = jnp.dtype(compute_dtype).itemsize
    out_item = jnp.dtype(out_dtype).itemsize

    # Small problems: pallas_call fixed overhead dominates -> plain XLA dot.
    approx_bytes = M * K * x.dtype.itemsize + K * N * w_item + M * N * out_item
    if not force_pallas and approx_bytes < (1 << 22):
        z = jnp.dot(x.astype(compute_dtype), params.w_kn[:K, :N],
                    preferred_element_type=jnp.float32)
        if has_bias:
            z = z + params.b_row[:, :N]
        if apply_relu:
            z = jnp.maximum(z, 0.0)
        return z.astype(out_dtype)

    # Tile selection: largest candidate that divides the padded dims exactly.
    Mp = _round_up(M, 8)
    tm = _pick_tile(Mp, (512, 256, 128, 64, 32, 16, 8))
    tn = _pick_tile(Np, (512, 256, 128))
    tk = _pick_tile(Kp, (1024, 512, 256, 128))

    # x fast path: no pad/cast materialization when already aligned; the kernel
    # casts the VMEM-resident tile to the compute dtype instead.
    if M == Mp and K == Kp:
        x_in = x
        cast_x = (x.dtype != compute_dtype)
    else:
        x_in = jnp.pad(x.astype(compute_dtype), ((0, Mp - M), (0, Kp - K)))
        cast_x = False

    use_acc = jnp.dtype(out_dtype) != jnp.dtype(jnp.float32)

    in_specs = [
        pl.BlockSpec((tm, tk), lambda i, j, k: (i, k)),
        pl.BlockSpec((tk, tn), lambda i, j, k: (k, j)),
    ]
    inputs = [x_in, params.w_kn]
    if has_bias:
        in_specs.append(pl.BlockSpec((1, tn), lambda i, j, k: (0, j)))
        inputs.append(params.b_row)

    scratch_shapes = [pltpu.VMEM((tm, tn), jnp.float32)] if use_acc else []

    kernel = functools.partial(
        _dense_kernel, has_bias=has_bias, apply_relu=apply_relu,
        cast_x=cast_x, use_acc=use_acc, compute_dtype=compute_dtype)

    x_item = jnp.dtype(x_in.dtype).itemsize
    vmem_budget = (2 * (tm * tk * x_item + tk * tn * w_item)
                   + 2 * tm * tn * out_item
                   + (2 * tn * 4 if has_bias else 0)
                   + (tm * tn * 4 if use_acc else 0))
    # Clamp to [32 MiB, 48 MiB]: safe on v7x (64 MiB physical VMEM) and ample
    # on v5e/v6e (128 MiB).
    vmem_limit = min(48 << 20, max(32 << 20, int(vmem_budget * 2)))

    out = pl.pallas_call(
        kernel,
        out_shape=jax.ShapeDtypeStruct((Mp, Np), out_dtype),
        grid_spec=pltpu.PrefetchScalarGridSpec(
            num_scalar_prefetch=0,
            grid=(Mp // tm, Np // tn, Kp // tk),
            in_specs=in_specs,
            out_specs=pl.BlockSpec((tm, tn), lambda i, j, k: (i, j)),
            scratch_shapes=scratch_shapes,
        ),
        compiler_params=pltpu.CompilerParams(
            dimension_semantics=("parallel", "parallel", "arbitrary"),
            vmem_limit_bytes=vmem_limit,
        ),
        cost_estimate=pl.CostEstimate(
            flops=2 * Mp * Np * Kp,
            transcendentals=0,
            bytes_accessed=(Mp * Kp * x_item + Kp * Np * w_item
                            + Mp * Np * out_item
                            + (Np * 4 if has_bias else 0)),
        ),
    )(*inputs)

    if Mp != M or Np != N:
        out = out[:M, :N]
    return out


def init_dense_params(key, n_input, n_output, use_bias=True, split_bias=False,
                      numerator=2):
    """Deterministic param init mirroring DenseLayer.__init__ / init_weights."""
    std = jnp.sqrt(numerator / n_input)
    W = jax.random.normal(key, (n_output, n_input), dtype=jnp.float32) * std
    if not use_bias:
        return W, None
    if split_bias:
        bias_pos = jnp.ones((n_output, 1), dtype=jnp.float32)
        bias_neg = -jnp.ones((n_output, 1), dtype=jnp.float32)
        bias = bias_pos + bias_neg          # property .b
    else:
        bias = jnp.zeros((n_output, 1), dtype=jnp.float32)
    return W, bias


if __name__ == "__main__":
    key = jax.random.PRNGKey(0)
    k_x, k_p, k_b, k_x2, k_p2 = jax.random.split(key, 5)

    # --- small demo shapes (module-consistent), forced through the Pallas
    # padding path so the kernel itself is exercised -------------------------
    batch, n_input, n_output = 8, 32, 16
    x = jax.random.normal(k_x, (batch, n_input), dtype=jnp.float32)
    W, _zero_bias = init_dense_params(k_p, n_input, n_output,
                                      use_bias=True, split_bias=False)
    # use a nonzero bias so the `z + b.T` path is actually verified
    bias = jax.random.normal(k_b, (n_output, 1), dtype=jnp.float32)
    params = prepare_dense_params(W, bias)

    out = jax.block_until_ready(
        dense_layer_forward(x, params, nonlinearity=None, force_pallas=True))
    # reference with the same bf16 weight/input quantization, f32 accumulation
    xb = x.astype(jnp.bfloat16).astype(jnp.float32)
    Wb = W.astype(jnp.bfloat16).astype(jnp.float32)
    ref = xb @ Wb.T + bias.T
    assert out.shape == (batch, n_output)
    assert jnp.allclose(out, ref, atol=1e-4, rtol=1e-4)

    # --- bf16-output path (exercises the scratch-accumulator branch) ---------
    out_bf = jax.block_until_ready(
        dense_layer_forward(x, params, nonlinearity=None,
                            out_dtype=jnp.bfloat16, force_pallas=True))
    assert out_bf.dtype == jnp.bfloat16
    assert jnp.allclose(out_bf.astype(jnp.float32), ref, atol=5e-2, rtol=5e-2)

    # --- lane-aligned multi-tile case: no pad / no slice fast path, relu -----
    batch2, n_in2, n_out2 = 256, 512, 384
    x2 = jax.random.normal(k_x2, (batch2, n_in2), dtype=jnp.float32)
    W2, _ = init_dense_params(k_p2, n_in2, n_out2, use_bias=False)
    params2 = prepare_dense_params(W2, None)

    out2 = jax.block_until_ready(
        dense_layer_forward(x2, params2, nonlinearity="relu", force_pallas=True))
    ref2 = jnp.maximum(
        x2.astype(jnp.bfloat16).astype(jnp.float32)
        @ W2.astype(jnp.bfloat16).astype(jnp.float32).T, 0.0)
    assert out2.shape == (batch2, n_out2)
    assert jnp.allclose(out2, ref2, atol=1e-3, rtol=1e-3)

    print("KERNEL_OK")
</pallas_src>

<mosaic_0001>
module attributes {stable_mosaic.version = 11 : i64} {
  func.func @_dense_kernel(%arg0: i32, %arg1: i32, %arg2: i32, %arg3: memref<8x128xbf16, #tpu.memory_space<vmem>>, %arg4: memref<128x128xbf16, #tpu.memory_space<vmem>>, %arg5: memref<1x128xf32, #tpu.memory_space<vmem>>, %arg6: memref<8x128xf32, #tpu.memory_space<vmem>>) attributes {dimension_semantics = [#tpu.dimension_semantics<parallel>, #tpu.dimension_semantics<parallel>, #tpu.dimension_semantics<arbitrary>], iteration_bounds = array<i64: 1, 1, 1>, scalar_prefetch = 0 : i64, scratch_operands = 0 : i64, tpu.core_type = #tpu.core_type<tc>, window_params = [{transform_indices = @transform_0, window_bounds = array<i64: 8, 128>}, {transform_indices = @transform_1, window_bounds = array<i64: 128, 128>}, {transform_indices = @transform_2, window_bounds = array<i64: 1, 128>}, {transform_indices = @transform_3, window_bounds = array<i64: 8, 128>}]} {
    %c0 = arith.constant 0 : index
    %c0_0 = arith.constant 0 : index
    %0 = vector.load %arg3[%c0, %c0_0] : memref<8x128xbf16, #tpu.memory_space<vmem>>, vector<8x128xbf16>
    %c0_1 = arith.constant 0 : index
    %c0_2 = arith.constant 0 : index
    %1 = vector.load %arg4[%c0_1, %c0_2] : memref<128x128xbf16, #tpu.memory_space<vmem>>, vector<128x128xbf16>
    %cst = arith.constant dense<0.000000e+00> : vector<8x128xf32>
    %2 = tpu.matmul %0, %1, %cst {dimension_numbers = #tpu.dot_dimension_numbers<[1], [0], [0], [1], [0, 0, 1, 1], [], []>} : vector<8x128xbf16>, vector<128x128xbf16>, vector<8x128xf32> -> vector<8x128xf32>
    %c0_i32 = arith.constant 0 : i32
    %3 = arith.cmpi eq, %arg2, %c0_i32 : i32
    %4 = arith.extui %3 : i1 to i32
    %c0_i32_3 = arith.constant 0 : i32
    %5 = arith.cmpi ne, %4, %c0_i32_3 : i32
    scf.if %5 {
      %c0_8 = arith.constant 0 : index
      %c0_9 = arith.constant 0 : index
      %12 = vector.load %arg6[%c0_8, %c0_9] : memref<8x128xf32, #tpu.memory_space<vmem>>, vector<8x128xf32>
      tpu.vector_store %arg6[%c0_8, %c0_9], %2 {strides = array<i32>} : memref<8x128xf32, #tpu.memory_space<vmem>>, vector<8x128xf32>,
    } else {
    }
    %c0_i32_4 = arith.constant 0 : i32
    %6 = arith.cmpi sgt, %arg2, %c0_i32_4 : i32
    %7 = arith.extui %6 : i1 to i32
    %c0_i32_5 = arith.constant 0 : i32
    %8 = arith.cmpi ne, %7, %c0_i32_5 : i32
    scf.if %8 {
      %c0_8 = arith.constant 0 : index
      %c0_9 = arith.constant 0 : index
      %12 = vector.load %arg6[%c0_8, %c0_9] : memref<8x128xf32, #tpu.memory_space<vmem>>, vector<8x128xf32>
      %13 = arith.addf %12, %2 : vector<8x128xf32>
      %c0_10 = arith.constant 0 : index
      %c0_11 = arith.constant 0 : index
      %14 = vector.load %arg6[%c0_10, %c0_11] : memref<8x128xf32, #tpu.memory_space<vmem>>, vector<8x128xf32>
      tpu.vector_store %arg6[%c0_10, %c0_11], %13 {strides = array<i32>} : memref<8x128xf32, #tpu.memory_space<vmem>>, vector<8x128xf32>,
    } else {
    }
    %c0_i32_6 = arith.constant 0 : i32
    %9 = arith.cmpi eq, %arg2, %c0_i32_6 : i32
    %10 = arith.extui %9 : i1 to i32
    %c0_i32_7 = arith.constant 0 : i32
    %11 = arith.cmpi ne, %10, %c0_i32_7 : i32
    scf.if %11 {
      %c0_8 = arith.constant 0 : index
      %c0_9 = arith.constant 0 : index
      %12 = vector.load %arg6[%c0_8, %c0_9] : memref<8x128xf32, #tpu.memory_space<vmem>>, vector<8x128xf32>
      %c0_10 = arith.constant 0 : index
      %c0_11 = arith.constant 0 : index
      %13 = vector.load %arg5[%c0_10, %c0_11] : memref<1x128xf32, #tpu.memory_space<vmem>>, vector<1x128xf32>
      %14 = vector.broadcast %13 : vector<1x128xf32> to vector<8x128xf32>
      %15 = arith.addf %12, %14 : vector<8x128xf32>
      %c0_12 = arith.constant 0 : index
      %c0_13 = arith.constant 0 : index
      %16 = vector.load %arg6[%c0_12, %c0_13] : memref<8x128xf32, #tpu.memory_space<vmem>>, vector<8x128xf32>
      tpu.vector_store %arg6[%c0_12, %c0_13], %15 {strides = array<i32>} : memref<8x128xf32, #tpu.memory_space<vmem>>, vector<8x128xf32>,
    } else {
    }
    return
  }
  func.func @transform_0(%arg0: i32, %arg1: i32, %arg2: i32) -> (i32, i32) {
    %c0_i32 = arith.constant 0 : i32
    return %arg0, %arg2 : i32, i32
  }
  func.func @transform_1(%arg0: i32, %arg1: i32, %arg2: i32) -> (i32, i32) {
    %c0_i32 = arith.constant 0 : i32
    return %arg2, %arg1 : i32, i32
  }
  func.func @transform_2(%arg0: i32, %arg1: i32, %arg2: i32) -> (i32, i32) {
    %c0_i32 = arith.constant 0 : i32
    %c0_i32_0 = arith.constant 0 : i32
    return %c0_i32, %arg1 : i32, i32
  }
  func.func @transform_3(%arg0: i32, %arg1: i32, %arg2: i32) -> (i32, i32) {
    %c0_i32 = arith.constant 0 : i32
    return %arg0, %arg1 : i32, i32
  }
}

</mosaic_0001>

<llo_original>
// kernel: tpu_custom_call.1
$region0: #{tpu_custom_call.1}
  #allocation0 [shape = 'u32[]', space=smem, size = 0x4, offset = 0x4, fixed_abs, tag = 'smem constant byte address 0x4 - core index']
  #allocation1 [shape = 'u32[144,128]{1,0:T(1,128)}', space=vmem, size = 0x12000, scoped, tag = 'internal scratch']
  %s0 = inlined_call_operand.hbm [shape: bf16[8,128], index: 0, kind: input, shape index: {}]
  %s1 = inlined_call_operand.hbm [shape: bf16[128,128], index: 1, kind: input, shape index: {}]
  %s2 = inlined_call_operand.vmem [shape: f32[1,128], index: 2, kind: input, shape index: {}]
  %s3 = inlined_call_operand.hbm [shape: f32[8,128], index: 3, kind: output, shape index: {}]
  %s4 = sld [smem:[#allocation0]]
  $region42: #{tpu_custom_call.1} parent=0
    _
  %s6 = ssub.s32 1, %s4
  %s7 = scalar_select 0, %s6, %s4
  $region1: #{tpu_custom_call.1} parent=0
    #allocation2 [shape = 'u8[2048]{0}', space=vmem, size = 0x800, scoped, tag = 'input window, operand 0, single buffered']
    #allocation3 [shape = 's32[1]{0}', space=sflag, size = 0x4, scoped, tag = 'scoped memory for tpu_custom_call.1']
    #allocation4 [shape = 's32[1]{0}', space=sflag, size = 0x4, scoped, tag = 'scoped memory for tpu_custom_call.1']
    #allocation5 [shape = 'u8[32768]{0}', space=vmem, size = 0x8000, scoped, tag = 'input window, operand 1, single buffered']
    #allocation6 [shape = 's32[1]{0}', space=sflag, size = 0x4, scoped, tag = 'scoped memory for tpu_custom_call.1']
    #allocation7 [shape = 'u8[4096]{0}', space=vmem, size = 0x1000, scoped, tag = 'output window, operand 0, single buffered']
    %8 = vsyncpa [#allocation3], 0
    %9 = vsyncpa [#allocation6], 0
    %10 = vsyncpa [#allocation4], 0
    // Predicated region
    $region2: #{tpu_custom_call.1} parent=1 // pred_check
      _
    $region3: #{tpu_custom_call.1} parent=1 // pred_check_branch
      %12 = sbr.rel (0) target = $region5
    $region4: #{tpu_custom_call.1} parent=1 // pred_region
      %s14 = ssub.s32 64, 64
      %15 = vsyncadd [#allocation3], %s14
      %s17 = sshll.u32 [#allocation2], 4
      %s18 = int_to_ptr.vmem [resolvable:$true] %s17
      %20 = dma.hbm_to_vmem [thread:$0]  %s0, 64, %s18, [#allocation3]
    $region5: #{tpu_custom_call.1} parent=1 // pred_fallthru
      _
    // Predicated region
    $region6: #{tpu_custom_call.1} parent=1 // pred_check
      _
    $region7: #{tpu_custom_call.1} parent=1 // pred_check_branch
      %22 = sbr.rel (0) target = $region9
    $region8: #{tpu_custom_call.1} parent=1 // pred_region
      %s24 = ssub.s32 1024, 1024
      %25 = vsyncadd [#allocation6], %s24
      %s26 = sshll.u32 [#allocation5], 4
      %s27 = int_to_ptr.vmem [resolvable:$true] %s26
      %32 = dma.hbm_to_vmem [thread:$0]  %s1, 1024, %s27, [#allocation6], 64, 64, 4
    $region9: #{tpu_custom_call.1} parent=1 // pred_fallthru
      _
    // Predicated region
    $region10: #{tpu_custom_call.1} parent=1 // pred_check
      _
    $region11: #{tpu_custom_call.1} parent=1 // pred_check_branch
      %34 = sbr.rel (0) target = $region13
    $region12: #{tpu_custom_call.1} parent=1 // pred_region
      _
    $region13: #{tpu_custom_call.1} parent=1 // pred_fallthru
      _
    // Predicated region
    $region14: #{tpu_custom_call.1} parent=1 // pred_check
      _
    $region15: #{tpu_custom_call.1} parent=1 // pred_check_branch
      %36 = sbr.rel (0) target = $region17
    $region16: #{tpu_custom_call.1} parent=1 // pred_region
      %37 = dma.done [#allocation3], 64
    $region17: #{tpu_custom_call.1} parent=1 // pred_fallthru
      _
    // Predicated region
    $region18: #{tpu_custom_call.1} parent=1 // pred_check
      _
    $region19: #{tpu_custom_call.1} parent=1 // pred_check_branch
      %39 = sbr.rel (0) target = $region21
    $region20: #{tpu_custom_call.1} parent=1 // pred_region
      %40 = dma.done [#allocation6], 1024
    $region21: #{tpu_custom_call.1} parent=1 // pred_fallthru
      _
    %v42 = vld [vmem:[#allocation2] sm:$0xf]
    %v43 = vld [vmem:[#allocation5] sm:$0xf]
    %v44 = vld [vmem:[#allocation5 + $0x4] sm:$0xf]
    %v45 = vld [vmem:[#allocation5 + $0x8] sm:$0xf]
    %v46 = vld [vmem:[#allocation5 + $0xc] sm:$0xf]
    %v47 = vld [vmem:[#allocation5 + $0x10] sm:$0xf]
    %v48 = vld [vmem:[#allocation5 + $0x14] sm:$0xf]
    %v49 = vld [vmem:[#allocation5 + $0x18] sm:$0xf]
    %v50 = vld [vmem:[#allocation5 + $0x1c] sm:$0xf]
    %v51 = vld [vmem:[#allocation5 + $0x20] sm:$0xf]
    %v52 = vld [vmem:[#allocation5 + $0x24] sm:$0xf]
    %v53 = vld [vmem:[#allocation5 + $0x28] sm:$0xf]
    %v54 = vld [vmem:[#allocation5 + $0x2c] sm:$0xf]
    %v55 = vld [vmem:[#allocation5 + $0x30] sm:$0xf]
    %v56 = vld [vmem:[#allocation5 + $0x34] sm:$0xf]
    %v57 = vld [vmem:[#allocation5 + $0x38] sm:$0xf]
    %v58 = vld [vmem:[#allocation5 + $0x3c] sm:$0xf]
    %v75 = vunpack.c.l.b16 %v43
    %v76 = vunpack.c.l.b16 %v44
    %v77 = vunpack.c.l.b16 %v45
    %v78 = vunpack.c.l.b16 %v46
    %v79 = vunpack.c.l.b16 %v47
    %v80 = vunpack.c.l.b16 %v48
    %v81 = vunpack.c.l.b16 %v49
    %v82 = vunpack.c.l.b16 %v50
    %v83 = vunpack.c.l.b16 %v51
    %v84 = vunpack.c.l.b16 %v52
    %v85 = vunpack.c.l.b16 %v53
    %v86 = vunpack.c.l.b16 %v54
    %v87 = vunpack.c.l.b16 %v55
    %v88 = vunpack.c.l.b16 %v56
    %v89 = vunpack.c.l.b16 %v57
    %v90 = vunpack.c.l.b16 %v58
    %v91 = vpack.c.b16 %v76, %v75
    %v92 = vpack.c.b16 %v78, %v77
    %v93 = vpack.c.b16 %v80, %v79
    %v94 = vpack.c.b16 %v82, %v81
    %v95 = vpack.c.b16 %v84, %v83
    %v96 = vpack.c.b16 %v86, %v85
    %v97 = vpack.c.b16 %v88, %v87
    %v98 = vpack.c.b16 %v90, %v89
    %107 = vmatprep.subr.bf16.mxu0 0
    %108 = vmatpush1.bf16.msra.mxu0 %v98
    %109 = vmatprep.subr.bf16.mxu0 0
    %110 = vmatpush1.bf16.msra.mxu0 %v97
    %111 = vmatprep.subr.bf16.mxu0 0
    %112 = vmatpush1.bf16.msra.mxu0 %v96
    %113 = vmatprep.subr.bf16.mxu0 0
    %114 = vmatpush1.bf16.msra.mxu0 %v95
    %115 = vmatprep.subr.bf16.mxu0 0
    %116 = vmatpush1.bf16.msra.mxu0 %v94
    %117 = vmatprep.subr.bf16.mxu0 0
    %118 = vmatpush1.bf16.msra.mxu0 %v93
    %119 = vmatprep.subr.bf16.mxu0 0
    %120 = vmatpush1.bf16.msra.mxu0 %v92
    %121 = vmatprep.subr.bf16.mxu0 0
    %122 = vmatpush1.bf16.msra.mxu0 %v91
    %123 = vmatprep.subr.bf16.mxu0 0
    %124 = vmatpush2.bf16.msra.mxu0 0
    %125 = vmatprep.subr.bf16.mxu0 0
    %126 = vmatpush2.bf16.msra.mxu0 0
    %127 = vmatprep.subr.bf16.mxu0 0
    %128 = vmatpush2.bf16.msra.mxu0 0
    %129 = vmatprep.subr.bf16.mxu0 0
    %130 = vmatpush2.bf16.msra.mxu0 0
    %131 = vmatprep.subr.bf16.mxu0 0
    %132 = vmatpush2.bf16.msra.mxu0 0
    %133 = vmatprep.subr.bf16.mxu0 0
    %134 = vmatpush2.bf16.msra.mxu0 0
    %135 = vmatprep.subr.bf16.mxu0 0
    %136 = vmatpush2.bf16.msra.mxu0 0
    %137 = vmatprep.subr.bf16.mxu0 0
    %138 = vmatpush2.bf16.msra.mxu0 0
    %139 = vmatprep.mubr.bf16.mxu0 0
    %140 = vmatmul.mubr.bf16.gmra.mxu0 %v42
    %v141 = vpop.f32.mrf.mxu0
    %v142 = vadd.f32 0.0, %v141
    %v143 = vpop.f32.mrf.mxu0
    %v144 = vpop.f32.mrf.mxu0
    %v145 = vpop.f32.mrf.mxu0
    %146 = vdwg.mxu0
    %p147 = scmp.eq.s32.totalorder 0, 0
    // Predicated region
    $region22: #{tpu_custom_call.1} parent=1 // pred_check
      %p148 = pneg %p147
    $region23: #{tpu_custom_call.1} parent=1 // pred_check_branch
      %150 = sbr.rel (%p148) target = $region25
    $region24: #{tpu_custom_call.1} parent=1 // pred_region
      %151 = vst [vmem:[#allocation7] sm:$0xff] %v142
    $region25: #{tpu_custom_call.1} parent=1 // pred_fallthru
      _
    %p152 = scmp.gt.s32.totalorder 0, 0
    // Predicated region
    $region26: #{tpu_custom_call.1} parent=1 // pred_check
      %p153 = pneg %p152
    $region27: #{tpu_custom_call.1} parent=1 // pred_check_branch
      %155 = sbr.rel (%p153) target = $region29
    $region28: #{tpu_custom_call.1} parent=1 // pred_region
      %v156 = vld [vmem:[#allocation7] sm:$0xff]
      %v157 = vadd.f32 %v156, %v142
      %158 = vst [vmem:[#allocation7] sm:$0xff] %v157
    $region29: #{tpu_custom_call.1} parent=1 // pred_fallthru
      _
    // Predicated region
    $region30: #{tpu_custom_call.1} parent=1 // pred_check
      %p159 = pneg %p147
    $region31: #{tpu_custom_call.1} parent=1 // pred_check_branch
      %161 = sbr.rel (%p159) target = $region33
    $region32: #{tpu_custom_call.1} parent=1 // pred_region
      %v162 = vld [vmem:[#allocation7] sm:$0xff]
      %v163 = vld [vmem:[%s2] sm:$0x1]
      %v165 = vlaneseq
      %v166 = vshrl.u32 %v165, 7
      %v167 = vsub.s32 0, %v166
      %v168 = vrot.slane %v163, %v167
      %v170 = vadd.f32 %v162, %v168
      %171 = vst [vmem:[#allocation7] sm:$0xff] %v170
    $region33: #{tpu_custom_call.1} parent=1 // pred_fallthru
      _
    // Predicated region
    $region34: #{tpu_custom_call.1} parent=1 // pred_check
      _
    $region35: #{tpu_custom_call.1} parent=1 // pred_check_branch
      %173 = sbr.rel (0) target = $region37
    $region36: #{tpu_custom_call.1} parent=1 // pred_region
      %s175 = ssub.s32 128, 128
      %176 = vsyncadd [#allocation4], %s175
      %s178 = sshll.u32 [#allocation7], 4
      %s179 = int_to_ptr.vmem [resolvable:$true] %s178
      %181 = dma.vmem_to_hbm [thread:$0]  %s179, 128, %s3, [#allocation4]
    $region37: #{tpu_custom_call.1} parent=1 // pred_fallthru
      _
    // Predicated region
    $region38: #{tpu_custom_call.1} parent=1 // pred_check
      _
    $region39: #{tpu_custom_call.1} parent=1 // pred_check_branch
      %183 = sbr.rel (0) target = $region41
    $region40: #{tpu_custom_call.1} parent=1 // pred_region
      %184 = dma.done [#allocation4], 128
    $region41: #{tpu_custom_call.1} parent=1 // pred_fallthru
      _
    %185 = vsyncpa [#allocation3], 1
    %186 = vsyncpa [#allocation6], 1
    %187 = vsyncpa [#allocation4], 1

</llo_original>
